<compile_context>
chip_gen: v7x
topology: tpu7x:2x2x1
jax: 0.10.0
libtpu: 0.0.40
codegen_flags: <defaults>
</compile_context>

<pallas_src>
import functools

import jax
import jax.numpy as jnp
from jax.experimental import pallas as pl
from jax.experimental.pallas import tpu as pltpu


# Weight layouts relative to the PyTorch module:
#   w1 = conv1.weight[:, :, 0, 0].T   -> (C, Cr)
#   b1 = conv1.bias[None, :]          -> (1, Cr)
#   w2 = conv2.weight[:, :, 0, 0]     -> (C, Cr)
#   b2 = conv2.bias[:, None]          -> (C, 1)


def _squeeze_excite(pooled_col, w1, b1, w2, b2):
    """pooled_col: (C, 1) f32 -> y: (C, 1) f32.  Pure VPU/XLU (no MXU)."""
    # FC1: h[r] = sum_c W1[r, c] * pooled[c] + b1[r]          -> (1, Cr)
    h = jnp.sum(w1 * pooled_col, axis=0, keepdims=True) + b1
    h = jnp.maximum(h, 0.0)
    # FC2: y[c] = sum_r W2[c, r] * h[r] + b2[c]               -> (C, 1)
    y = jnp.sum(w2 * h, axis=1, keepdims=True) + b2
    return jax.nn.sigmoid(y)


def _ca_fused_kernel(x_ref, w1_ref, b1_ref, w2_ref, b2_ref, o_ref):
    """Single-pass kernel: one batch element, full (C, HW) block resident."""
    x = x_ref[0].astype(jnp.float32)                      # (C, HW)
    pooled = jnp.mean(x, axis=1, keepdims=True)           # (C, 1)  lane reduce
    y = _squeeze_excite(pooled, w1_ref[...], b1_ref[...],
                        w2_ref[...], b2_ref[...])         # (C, 1)
    o_ref[0] = (x * y).astype(o_ref.dtype)                # lane broadcast


def _ca_pool_kernel(x_ref, p_ref, acc_ref, *, inv_hw):
    """Pass 1: accumulate spatial sum of one HW tile into a (C, 1) scratch."""
    t = pl.program_id(1)

    @pl.when(t == 0)
    def _():
        acc_ref[...] = jnp.zeros_like(acc_ref)

    acc_ref[...] += jnp.sum(x_ref[0].astype(jnp.float32), axis=1, keepdims=True)

    @pl.when(t == pl.num_programs(1) - 1)
    def _():
        p_ref[0] = (acc_ref[...] * inv_hw).astype(p_ref.dtype)


def _ca_fc_kernel(p_ref, w1_ref, b1_ref, w2_ref, b2_ref, y_ref):
    """Pass 2: squeeze-excite FCs + sigmoid (tiny, once per batch element)."""
    y = _squeeze_excite(p_ref[0], w1_ref[...], b1_ref[...],
                        w2_ref[...], b2_ref[...])
    y_ref[0] = y.astype(y_ref.dtype)


def _ca_scale_kernel(x_ref, y_ref, o_ref):
    """Pass 3: out = x * y (per-channel scale broadcast over lanes)."""
    o_ref[0] = (x_ref[0].astype(jnp.float32) * y_ref[0]).astype(o_ref.dtype)


_SINGLE_PASS_MAX_BLOCK_BYTES = 4 * 1024 * 1024   # per-batch (C, HW) block
_DEFAULT_HW_TILE = 8192                          # lanes per tile (mult of 128)


def ca_layer_pallas(x_nchw, w1, b1, w2, b2, *, hw_tile=None):
    """Channel-attention forward.

    x_nchw : (N, C, H, W)
    w1     : (C, Cr)    b1 : (1, Cr)
    w2     : (C, Cr)    b2 : (C, 1)
    returns (N, C, H, W)
    """
    N, C, H, W = x_nchw.shape
    HW = H * W
    Cr = w1.shape[1]
    itemsize = jnp.dtype(x_nchw.dtype).itemsize

    # Free view (no transpose, no copy).
    x = x_nchw.reshape(N, C, HW)

    weight_specs = [
        pl.BlockSpec((C, Cr), lambda n: (0, 0)),
        pl.BlockSpec((1, Cr), lambda n: (0, 0)),
        pl.BlockSpec((C, Cr), lambda n: (0, 0)),
        pl.BlockSpec((C, 1), lambda n: (0, 0)),
    ]

    block_bytes = C * HW * itemsize
    if hw_tile is None and block_bytes <= _SINGLE_PASS_MAX_BLOCK_BYTES:
        # ---------- small-image path: single fused pass per batch ----------
        out = pl.pallas_call(
            _ca_fused_kernel,
            out_shape=jax.ShapeDtypeStruct((N, C, HW), x.dtype),
            grid_spec=pltpu.PrefetchScalarGridSpec(
                num_scalar_prefetch=0,
                grid=(N,),
                in_specs=[pl.BlockSpec((1, C, HW), lambda n: (n, 0, 0))]
                + weight_specs,
                out_specs=pl.BlockSpec((1, C, HW), lambda n: (n, 0, 0)),
            ),
            compiler_params=pltpu.CompilerParams(
                dimension_semantics=("parallel",)),
            cost_estimate=pl.CostEstimate(
                flops=int(2 * N * C * HW + 4 * N * C * Cr),
                transcendentals=int(N * C),
                bytes_accessed=int(2 * N * C * HW * itemsize)),
        )(x, w1, b1, w2, b2)
        return out.reshape(N, C, H, W)

    # -------------- large-image path: HW-tiled, three passes ---------------
    if hw_tile is None:
        hw_tile = _DEFAULT_HW_TILE
    n_tiles = pl.cdiv(HW, hw_tile)
    HW_pad = n_tiles * hw_tile
    xp = x if HW_pad == HW else jnp.pad(
        x, ((0, 0), (0, 0), (0, HW_pad - HW)))   # zero pad: no effect on sum

    # Pass 1: global average pool (reduction axis last, "arbitrary").
    pooled = pl.pallas_call(
        functools.partial(_ca_pool_kernel, inv_hw=1.0 / HW),
        out_shape=jax.ShapeDtypeStruct((N, C, 1), jnp.float32),
        grid_spec=pltpu.PrefetchScalarGridSpec(
            num_scalar_prefetch=0,
            grid=(N, n_tiles),
            in_specs=[pl.BlockSpec((1, C, hw_tile), lambda n, t: (n, 0, t))],
            out_specs=pl.BlockSpec((1, C, 1), lambda n, t: (n, 0, 0)),
            scratch_shapes=[pltpu.VMEM((C, 1), jnp.float32)],
        ),
        compiler_params=pltpu.CompilerParams(
            dimension_semantics=("parallel", "arbitrary")),
        cost_estimate=pl.CostEstimate(
            flops=int(N * C * HW_pad),
            transcendentals=0,
            bytes_accessed=int(N * C * HW_pad * itemsize)),
    )(xp)

    # Pass 2: the two 1x1-conv FCs + sigmoid, batched across N (tiny).
    y = pl.pallas_call(
        _ca_fc_kernel,
        out_shape=jax.ShapeDtypeStruct((N, C, 1), jnp.float32),
        grid_spec=pltpu.PrefetchScalarGridSpec(
            num_scalar_prefetch=0,
            grid=(N,),
            in_specs=[pl.BlockSpec((1, C, 1), lambda n: (n, 0, 0))]
            + weight_specs,
            out_specs=pl.BlockSpec((1, C, 1), lambda n: (n, 0, 0)),
        ),
        compiler_params=pltpu.CompilerParams(
            dimension_semantics=("parallel",)),
    )(pooled, w1, b1, w2, b2)

    # Pass 3: out = x * y, fully parallel grid (shards over both TCs on v7x).
    outp = pl.pallas_call(
        _ca_scale_kernel,
        out_shape=jax.ShapeDtypeStruct((N, C, HW_pad), x.dtype),
        grid_spec=pltpu.PrefetchScalarGridSpec(
            num_scalar_prefetch=0,
            grid=(N, n_tiles),
            in_specs=[
                pl.BlockSpec((1, C, hw_tile), lambda n, t: (n, 0, t)),
                pl.BlockSpec((1, C, 1), lambda n, t: (n, 0, 0)),
            ],
            out_specs=pl.BlockSpec((1, C, hw_tile), lambda n, t: (n, 0, t)),
        ),
        compiler_params=pltpu.CompilerParams(
            dimension_semantics=("parallel", "parallel")),
        cost_estimate=pl.CostEstimate(
            flops=int(N * C * HW_pad),
            transcendentals=0,
            bytes_accessed=int(2 * N * C * HW_pad * itemsize)),
    )(xp, y)

    out = outp if HW_pad == HW else outp[:, :, :HW]
    return out.reshape(N, C, H, W)


def _reference(x_nchw, w1, b1, w2, b2):
    # Pure-JAX reference matching the PyTorch module semantics.
    pooled = jnp.mean(x_nchw, axis=(2, 3))                   # (N, C)
    h = jnp.maximum(pooled @ w1 + b1, 0.0)                   # (N, Cr)
    y = jax.nn.sigmoid(h @ w2.T + b2.reshape(1, -1))         # (N, C)
    return x_nchw * y[:, :, None, None]


if __name__ == "__main__":
    # Shapes consistent with CALayer(channel=64, reduction=16).
    N, C, reduction = 2, 64, 16
    Cr = C // reduction

    key = jax.random.PRNGKey(0)
    kx, kx2, kw1, kb1, kw2, kb2 = jax.random.split(key, 6)

    w1 = jax.random.normal(kw1, (C, Cr), dtype=jnp.float32) * 0.1
    b1 = jax.random.normal(kb1, (1, Cr), dtype=jnp.float32) * 0.1
    w2 = jax.random.normal(kw2, (C, Cr), dtype=jnp.float32) * 0.1
    b2 = jax.random.normal(kb2, (C, 1), dtype=jnp.float32) * 0.1

    # Case 1: 16x16 image -> single-pass fused kernel.
    x = jax.random.normal(kx, (N, C, 16, 16), dtype=jnp.float32)
    out = jax.block_until_ready(ca_layer_pallas(x, w1, b1, w2, b2))
    ref = _reference(x, w1, b1, w2, b2)
    assert out.shape == x.shape
    assert jnp.allclose(out, ref, atol=1e-5, rtol=1e-5), "fused path mismatch"

    # Case 2: force the HW-tiled three-pass path (incl. non-divisible HW).
    x2 = jax.random.normal(kx2, (N, C, 12, 12), dtype=jnp.float32)
    out2 = jax.block_until_ready(
        ca_layer_pallas(x2, w1, b1, w2, b2, hw_tile=128))
    ref2 = _reference(x2, w1, b1, w2, b2)
    assert out2.shape == x2.shape
    assert jnp.allclose(out2, ref2, atol=1e-5, rtol=1e-5), "tiled path mismatch"

    print("KERNEL_OK")
</pallas_src>

<mosaic_0001>
module attributes {stable_mosaic.version = 11 : i64} {
  func.func @_ca_fused_kernel(%arg0: i32, %arg1: memref<1x64x256xf32, #tpu.memory_space<vmem>>, %arg2: memref<64x4xf32, #tpu.memory_space<vmem>>, %arg3: memref<1x4xf32, #tpu.memory_space<vmem>>, %arg4: memref<64x4xf32, #tpu.memory_space<vmem>>, %arg5: memref<64x1xf32, #tpu.memory_space<vmem>>, %arg6: memref<1x64x256xf32, #tpu.memory_space<vmem>>) attributes {dimension_semantics = [#tpu.dimension_semantics<parallel>], iteration_bounds = array<i64: 2>, scalar_prefetch = 0 : i64, scratch_operands = 0 : i64, tpu.core_type = #tpu.core_type<tc>, window_params = [{transform_indices = @transform_0, window_bounds = array<i64: 1, 64, 256>}, {pipeline_mode = #tpu.pipeline_mode<synchronous>, transform_indices = @transform_1, window_bounds = array<i64: 64, 4>}, {pipeline_mode = #tpu.pipeline_mode<synchronous>, transform_indices = @transform_2, window_bounds = array<i64: 1, 4>}, {pipeline_mode = #tpu.pipeline_mode<synchronous>, transform_indices = @transform_3, window_bounds = array<i64: 64, 4>}, {pipeline_mode = #tpu.pipeline_mode<synchronous>, transform_indices = @transform_4, window_bounds = array<i64: 64, 1>}, {transform_indices = @transform_5, window_bounds = array<i64: 1, 64, 256>}]} {
    %c0 = arith.constant 0 : index
    %c0_0 = arith.constant 0 : index
    %c0_1 = arith.constant 0 : index
    %0 = vector.load %arg1[%c0, %c0_0, %c0_1] : memref<1x64x256xf32, #tpu.memory_space<vmem>>, vector<1x64x256xf32>
    %1 = vector.shape_cast %0 : vector<1x64x256xf32> to vector<64x256xf32>
    %cst = arith.constant dense<0.000000e+00> : vector<64xf32>
    %2 = vector.multi_reduction <add>, %1, %cst [1] : vector<64x256xf32> to vector<64xf32>
    %3 = vector.shape_cast %2 : vector<64xf32> to vector<64x1xf32>
    %cst_2 = arith.constant 2.560000e+02 : f32
    %4 = vector.broadcast %cst_2 : f32 to vector<64x1xf32>
    %5 = arith.divf %3, %4 : vector<64x1xf32>
    %c0_3 = arith.constant 0 : index
    %c0_4 = arith.constant 0 : index
    %6 = vector.load %arg2[%c0_3, %c0_4] : memref<64x4xf32, #tpu.memory_space<vmem>>, vector<64x4xf32>
    %c0_5 = arith.constant 0 : index
    %c0_6 = arith.constant 0 : index
    %7 = vector.load %arg3[%c0_5, %c0_6] : memref<1x4xf32, #tpu.memory_space<vmem>>, vector<1x4xf32>
    %c0_7 = arith.constant 0 : index
    %c0_8 = arith.constant 0 : index
    %8 = vector.load %arg4[%c0_7, %c0_8] : memref<64x4xf32, #tpu.memory_space<vmem>>, vector<64x4xf32>
    %c0_9 = arith.constant 0 : index
    %c0_10 = arith.constant 0 : index
    %9 = vector.load %arg5[%c0_9, %c0_10] : memref<64x1xf32, #tpu.memory_space<vmem>>, vector<64x1xf32>
    %10 = vector.broadcast %5 : vector<64x1xf32> to vector<64x4xf32>
    %11 = arith.mulf %6, %10 : vector<64x4xf32>
    %cst_11 = arith.constant dense<0.000000e+00> : vector<4xf32>
    %12 = vector.multi_reduction <add>, %11, %cst_11 [0] : vector<64x4xf32> to vector<4xf32>
    %13 = vector.shape_cast %12 : vector<4xf32> to vector<1x4xf32>
    %14 = arith.addf %13, %7 : vector<1x4xf32>
    %cst_12 = arith.constant 0.000000e+00 : f32
    %15 = vector.broadcast %cst_12 : f32 to vector<1x4xf32>
    %16 = arith.maximumf %14, %15 : vector<1x4xf32>
    %17 = vector.broadcast %16 : vector<1x4xf32> to vector<64x4xf32>
    %18 = arith.mulf %8, %17 : vector<64x4xf32>
    %cst_13 = arith.constant dense<0.000000e+00> : vector<64xf32>
    %19 = vector.multi_reduction <add>, %18, %cst_13 [1] : vector<64x4xf32> to vector<64xf32>
    %20 = vector.shape_cast %19 : vector<64xf32> to vector<64x1xf32>
    %21 = arith.addf %20, %9 : vector<64x1xf32>
    %22 = arith.negf %21 : vector<64x1xf32>
    %23 = math.exp %22 : vector<64x1xf32>
    %cst_14 = arith.constant 1.000000e+00 : f32
    %24 = vector.broadcast %cst_14 : f32 to vector<64x1xf32>
    %25 = arith.addf %24, %23 : vector<64x1xf32>
    %26 = arith.divf %24, %25 : vector<64x1xf32>
    %27 = vector.broadcast %26 : vector<64x1xf32> to vector<64x256xf32>
    %28 = arith.mulf %1, %27 : vector<64x256xf32>
    %c0_15 = arith.constant 0 : index
    %c0_16 = arith.constant 0 : index
    %c0_17 = arith.constant 0 : index
    %29 = vector.load %arg6[%c0_15, %c0_16, %c0_17] : memref<1x64x256xf32, #tpu.memory_space<vmem>>, vector<1x64x256xf32>
    %30 = vector.shape_cast %29 : vector<1x64x256xf32> to vector<64x256xf32>
    %31 = vector.shape_cast %28 : vector<64x256xf32> to vector<1x64x256xf32>
    tpu.vector_store %arg6[%c0_15, %c0_16, %c0_17], %31 {strides = array<i32>} : memref<1x64x256xf32, #tpu.memory_space<vmem>>, vector<1x64x256xf32>,
    return
  }
  func.func @transform_0(%arg0: i32) -> (i32, i32, i32) {
    %c0_i32 = arith.constant 0 : i32
    %c0_i32_0 = arith.constant 0 : i32
    %c0_i32_1 = arith.constant 0 : i32
    return %arg0, %c0_i32, %c0_i32_0 : i32, i32, i32
  }
  func.func @transform_1(%arg0: i32) -> (i32, i32) {
    %c0_i32 = arith.constant 0 : i32
    %c0_i32_0 = arith.constant 0 : i32
    %c0_i32_1 = arith.constant 0 : i32
    return %c0_i32, %c0_i32_0 : i32, i32
  }
  func.func @transform_2(%arg0: i32) -> (i32, i32) {
    %c0_i32 = arith.constant 0 : i32
    %c0_i32_0 = arith.constant 0 : i32
    %c0_i32_1 = arith.constant 0 : i32
    return %c0_i32, %c0_i32_0 : i32, i32
  }
  func.func @transform_3(%arg0: i32) -> (i32, i32) {
    %c0_i32 = arith.constant 0 : i32
    %c0_i32_0 = arith.constant 0 : i32
    %c0_i32_1 = arith.constant 0 : i32
    return %c0_i32, %c0_i32_0 : i32, i32
  }
  func.func @transform_4(%arg0: i32) -> (i32, i32) {
    %c0_i32 = arith.constant 0 : i32
    %c0_i32_0 = arith.constant 0 : i32
    %c0_i32_1 = arith.constant 0 : i32
    return %c0_i32, %c0_i32_0 : i32, i32
  }
  func.func @transform_5(%arg0: i32) -> (i32, i32, i32) {
    %c0_i32 = arith.constant 0 : i32
    %c0_i32_0 = arith.constant 0 : i32
    %c0_i32_1 = arith.constant 0 : i32
    return %arg0, %c0_i32, %c0_i32_0 : i32, i32, i32
  }
}

</mosaic_0001>

<llo_original>
// kernel: tpu_custom_call.1
$region0: #{tpu_custom_call.1}
  #allocation0 [shape = 'u32[]', space=smem, size = 0x4, offset = 0x4, fixed_abs, tag = 'smem constant byte address 0x4 - core index']
  #allocation1 [shape = 'u32[144,128]{1,0:T(1,128)}', space=vmem, size = 0x12000, scoped, tag = 'internal scratch']
  %s0 = inlined_call_operand.hbm [shape: f32[2,64,256], index: 0, kind: input, shape index: {}]
  %s1 = inlined_call_operand.vmem [shape: f32[64,4], index: 1, kind: input, shape index: {}]
  %s2 = inlined_call_operand.vmem [shape: f32[1,4], index: 2, kind: input, shape index: {}]
  %s3 = inlined_call_operand.vmem [shape: f32[64,4], index: 3, kind: input, shape index: {}]
  %s4 = inlined_call_operand.vmem [shape: f32[64,1], index: 4, kind: input, shape index: {}]
  %s5 = inlined_call_operand.hbm [shape: f32[2,64,256], index: 5, kind: output, shape index: {}]
  %s6 = sld [smem:[#allocation0]]
  $region57: #{tpu_custom_call.1} parent=0
    _
  %s8 = ssub.s32 1, %s6
  %s9 = scalar_select 0, %s8, %s6
  $region1: #{tpu_custom_call.1} parent=0
    #allocation2 [shape = 'u8[131072]{0}', space=vmem, size = 0x20000, scoped, tag = 'input window, operand 0']
    #allocation3 [shape = 's32[2]{0}', space=sflag, size = 0x8, scoped, tag = 'scoped memory for tpu_custom_call.1']
    #allocation4 [shape = 's32[2]{0}', space=sflag, size = 0x8, scoped, tag = 'scoped memory for tpu_custom_call.1']
    #allocation5 [shape = 'u8[131072]{0}', space=vmem, size = 0x20000, scoped, tag = 'output window, operand 0']
    %10 = vsyncpa [#allocation3], 0
    %s11 = scalar_lea.sflag [#allocation3], 1
    %12 = vsyncpa %s11, 0
    %13 = vsyncpa [#allocation4], 0
    %s14 = scalar_lea.sflag [#allocation4], 1
    %15 = vsyncpa %s14, 0
    loop: start=0, step=1, limit=4
    $region2: #{tpu_custom_call.1} parent=1 // loop_pre_header
      _
    $region3: #{tpu_custom_call.1} parent=1 // loop_header
      %s17 = sphi 0, %s21
      %p18 = scmp.ge.s32.totalorder %s17, 4
      %s27 = sphi 0, %s29
      %s30 = sphi 0, %s27
      %s31 = sphi 0, %s30
      %s47 = sphi 0, %s31
      %s51 = sphi 0, %s51
      %s53 = sphi 0, %s51
      %s54 = sphi 0, %s53
      %s68 = sphi 0, %s54
      %s72 = sphi 0, %s72
      %s74 = sphi 0, %s72
      %s75 = sphi 0, %s74
      %s89 = sphi 0, %s75
      %s93 = sphi 0, %s93
      %s95 = sphi 0, %s93
      %s96 = sphi 0, %s95
      %s110 = sphi 0, %s96
      %s114 = sphi 0, %s114
      %s116 = sphi 0, %s114
      %s117 = sphi 0, %s116
      %s131 = sphi 0, %s117
      %s137 = sphi 0, %s139
      %s140 = sphi 0, %s137
      %s141 = sphi 0, %s140
      %s157 = sphi 0, %s141
    $region4: #{tpu_custom_call.1} parent=1 // loop_header_branch
      %20 = sbr.rel (%p18) target = $region8
    $region5: #{tpu_custom_call.1} parent=1 // loop_body
      %s22 = ssub.s32 %s17, 1
      %s23 = ssub.s32 %s17, 2
      %s24 = sadd.s32 %s17, 1
      %s25 = ssub.s32 %s17, %s24
      %p26 = scmp.eq.s32.totalorder %s25, 0
      %s28 = sadd.s32 %s27, 1
      %s29 = scalar_select %p26, %s27, %s28
      %p32 = pneg %p26
      %p33 = scmp.eq.s32.totalorder %s17, 1
      %p34 = por %p32, %p33
      %p35 = scmp.ne.s32.totalorder %s27, %s30
      %p36 = scmp.eq.s32.totalorder %s17, 0
      %p37 = por %p35, %p36
      %p38 = scmp.ne.s32.totalorder %s27, %s30
      %p39 = scmp.eq.s32.totalorder %s22, 1
      %p40 = por %p38, %p39
      %p41 = scmp.ne.s32.totalorder %s30, %s31
      %p42 = scmp.eq.s32.totalorder %s22, 0
      %p43 = por %p41, %p42
      %p44 = scmp.ne.s32.totalorder %s30, %s31
      %p45 = scmp.eq.s32.totalorder %s23, 1
      %p46 = por %p44, %p45
      %p48 = scmp.ne.s32.totalorder %s31, %s47
      %p49 = scmp.eq.s32.totalorder %s23, 0
      %p50 = por %p48, %p49
      %s52 = sadd.s32 %s51, 1
      %p55 = scmp.eq.s32.totalorder %s17, 1
      %p56 = scmp.ne.s32.totalorder %s51, %s53
      %p57 = scmp.eq.s32.totalorder %s17, 0
      %p58 = por %p56, %p57
      %p59 = scmp.ne.s32.totalorder %s51, %s53
      %p60 = scmp.eq.s32.totalorder %s22, 1
      %p61 = por %p59, %p60
      %p62 = scmp.ne.s32.totalorder %s53, %s54
      %p63 = scmp.eq.s32.totalorder %s22, 0
      %p64 = por %p62, %p63
      %p65 = scmp.ne.s32.totalorder %s53, %s54
      %p66 = scmp.eq.s32.totalorder %s23, 1
      %p67 = por %p65, %p66
      %p69 = scmp.ne.s32.totalorder %s54, %s68
      %p70 = scmp.eq.s32.totalorder %s23, 0
      %p71 = por %p69, %p70
      %s73 = sadd.s32 %s72, 1
      %p76 = scmp.eq.s32.totalorder %s17, 1
      %p77 = scmp.ne.s32.totalorder %s72, %s74
      %p78 = scmp.eq.s32.totalorder %s17, 0
      %p79 = por %p77, %p78
      %p80 = scmp.ne.s32.totalorder %s72, %s74
      %p81 = scmp.eq.s32.totalorder %s22, 1
      %p82 = por %p80, %p81
      %p83 = scmp.ne.s32.totalorder %s74, %s75
      %p84 = scmp.eq.s32.totalorder %s22, 0
      %p85 = por %p83, %p84
      %p86 = scmp.ne.s32.totalorder %s74, %s75
      %p87 = scmp.eq.s32.totalorder %s23, 1
      %p88 = por %p86, %p87
      %p90 = scmp.ne.s32.totalorder %s75, %s89
      %p91 = scmp.eq.s32.totalorder %s23, 0
      %p92 = por %p90, %p91
      %s94 = sadd.s32 %s93, 1
      %p97 = scmp.eq.s32.totalorder %s17, 1
      %p98 = scmp.ne.s32.totalorder %s93, %s95
      %p99 = scmp.eq.s32.totalorder %s17, 0
      %p100 = por %p98, %p99
      %p101 = scmp.ne.s32.totalorder %s93, %s95
      %p102 = scmp.eq.s32.totalorder %s22, 1
      %p103 = por %p101, %p102
      %p104 = scmp.ne.s32.totalorder %s95, %s96
      %p105 = scmp.eq.s32.totalorder %s22, 0
      %p106 = por %p104, %p105
      %p107 = scmp.ne.s32.totalorder %s95, %s96
      %p108 = scmp.eq.s32.totalorder %s23, 1
      %p109 = por %p107, %p108
      %p111 = scmp.ne.s32.totalorder %s96, %s110
      %p112 = scmp.eq.s32.totalorder %s23, 0
      %p113 = por %p111, %p112
      %s115 = sadd.s32 %s114, 1
      %p118 = scmp.eq.s32.totalorder %s17, 1
      %p119 = scmp.ne.s32.totalorder %s114, %s116
      %p120 = scmp.eq.s32.totalorder %s17, 0
      %p121 = por %p119, %p120
      %p122 = scmp.ne.s32.totalorder %s114, %s116
      %p123 = scmp.eq.s32.totalorder %s22, 1
      %p124 = por %p122, %p123
      %p125 = scmp.ne.s32.totalorder %s116, %s117
      %p126 = scmp.eq.s32.totalorder %s22, 0
      %p127 = por %p125, %p126
      %p128 = scmp.ne.s32.totalorder %s116, %s117
      %p129 = scmp.eq.s32.totalorder %s23, 1
      %p130 = por %p128, %p129
      %p132 = scmp.ne.s32.totalorder %s117, %s131
      %p133 = scmp.eq.s32.totalorder %s23, 0
      %p134 = por %p132, %p133
      %s135 = ssub.s32 %s17, %s24
      %p136 = scmp.eq.s32.totalorder %s135, 0
      %s138 = sadd.s32 %s137, 1
      %s139 = scalar_select %p136, %s137, %s138
      %p142 = pneg %p136
      %p143 = scmp.eq.s32.totalorder %s17, 1
      %p144 = por %p142, %p143
      %p145 = scmp.ne.s32.totalorder %s137, %s140
      %p146 = scmp.eq.s32.totalorder %s17, 0
      %p147 = por %p145, %p146
      %p148 = scmp.ne.s32.totalorder %s137, %s140
      %p149 = scmp.eq.s32.totalorder %s22, 1
      %p150 = por %p148, %p149
      %p151 = scmp.ne.s32.totalorder %s140, %s141
      %p152 = scmp.eq.s32.totalorder %s22, 0
      %p153 = por %p151, %p152
      %p154 = scmp.ne.s32.totalorder %s140, %s141
      %p155 = scmp.eq.s32.totalorder %s23, 1
      %p156 = por %p154, %p155
      %p158 = scmp.ne.s32.totalorder %s141, %s157
      %p159 = scmp.eq.s32.totalorder %s23, 0
      %p160 = por %p158, %p159
      %p161 = scmp.le.s32.totalorder 1, %s17
      %p162 = scmp.lt.s32.totalorder %s17, 3
      %p163 = pnand %p161, %p162
      %p164 = pneg %p163
      // Predicated region
      $region9: #{tpu_custom_call.1} parent=5 // pred_check
        _
      $region10: #{tpu_custom_call.1} parent=5 // pred_check_branch
        %166 = sbr.rel (%p163) target = $region12
      $region11: #{tpu_custom_call.1} parent=5 // pred_region
        %s167 = ssub.s32 %s17, 1
        // Predicated region
        $region13: #{tpu_custom_call.1} parent=11 // pred_check
          %p168 = pneg %p64
        $region14: #{tpu_custom_call.1} parent=11 // pred_check_branch
          %170 = sbr.rel (%p168) target = $region16
        $region15: #{tpu_custom_call.1} parent=11 // pred_region
          _
        $region16: #{tpu_custom_call.1} parent=11 // pred_fallthru
          _
        // Predicated region
        $region17: #{tpu_custom_call.1} parent=11 // pred_check
          %p171 = pneg %p85
        $region18: #{tpu_custom_call.1} parent=11 // pred_check_branch
          %173 = sbr.rel (%p171) target = $region20
        $region19: #{tpu_custom_call.1} parent=11 // pred_region
          _
        $region20: #{tpu_custom_call.1} parent=11 // pred_fallthru
          _
        // Predicated region
        $region21: #{tpu_custom_call.1} parent=11 // pred_check
          %p174 = pneg %p106
        $region22: #{tpu_custom_call.1} parent=11 // pred_check_branch
          %176 = sbr.rel (%p174) target = $region24
        $region23: #{tpu_custom_call.1} parent=11 // pred_region
          _
        $region24: #{tpu_custom_call.1} parent=11 // pred_fallthru
          _
        // Predicated region
        $region25: #{tpu_custom_call.1} parent=11 // pred_check
          %p177 = pneg %p127
        $region26: #{tpu_custom_call.1} parent=11 // pred_check_branch
          %179 = sbr.rel (%p177) target = $region28
        $region27: #{tpu_custom_call.1} parent=11 // pred_region
          _
        $region28: #{tpu_custom_call.1} parent=11 // pred_fallthru
          _
      $region12: #{tpu_custom_call.1} parent=5 // pred_fallthru
        _
      %p180 = scmp.lt.s32.totalorder %s17, 2
      // Predicated region
      $region29: #{tpu_custom_call.1} parent=5 // pred_check
        %p181 = pneg %p180
      $region30: #{tpu_custom_call.1} parent=5 // pred_check_branch
        %183 = sbr.rel (%p181) target = $region32
      $region31: #{tpu_custom_call.1} parent=5 // pred_region
        // Predicated region
        $region33: #{tpu_custom_call.1} parent=31 // pred_check
          %p184 = pneg %p37
        $region34: #{tpu_custom_call.1} parent=31 // pred_check_branch
          %186 = sbr.rel (%p184) target = $region36
        $region35: #{tpu_custom_call.1} parent=31 // pred_region
          %s187 = sand.u32 %s27, 1
          %s188 = scalar_lea.sflag [#allocation3], %s187
          %s189 = sand.u32 %s27, 1
          %s190 = smul.addr %s189, 128
          %s191 = scalar_lea.vmem [#allocation2], %s190
          %s193 = ssub.s32 2048, 2048
          %194 = vsyncadd %s188, %s193
          %s195 = smul.addr %s17, 16
          %s196 = smul.addr %s195, 128
          %s197 = scalar_lea.hbm %s0, %s196
          %s198 = sshll.u32 %s191, 4
          %s199 = int_to_ptr.vmem [resolvable:$true] %s198
          %204 = dma.hbm_to_vmem [thread:$0]  %s197, 2048, %s199, %s188, 256, 256, 16
        $region36: #{tpu_custom_call.1} parent=31 // pred_fallthru
          _
      $region32: #{tpu_custom_call.1} parent=5 // pred_fallthru
        _
      %p205 = scmp.le.s32.totalorder 1, %s17
      %p206 = scmp.lt.s32.totalorder %s17, 3
      %p207 = pnand %p205, %p206
      %p208 = pneg %p207
      // Predicated region
      $region37: #{tpu_custom_call.1} parent=5 // pred_check
        _
      $region38: #{tpu_custom_call.1} parent=5 // pred_check_branch
        %210 = sbr.rel (%p207) target = $region40
      $region39: #{tpu_custom_call.1} parent=5 // pred_region
        %s211 = ssub.s32 %s17, 1
        %s212 = sand.u32 %s30, 1
        %s213 = scalar_lea.sflag [#allocation3], %s212
        %s214 = sand.u32 %s30, 1
        %s215 = smul.addr %s214, 128
        %s216 = scalar_lea.vmem [#allocation2], %s215
        // Predicated region
        $region41: #{tpu_custom_call.1} parent=39 // pred_check
          %p217 = pneg %p43
        $region42: #{tpu_custom_call.1} parent=39 // pred_check_branch
          %219 = sbr.rel (%p217) target = $region44
        $region43: #{tpu_custom_call.1} parent=39 // pred_region
          %220 = dma.done %s213, 2048
        $region44: #{tpu_custom_call.1} parent=39 // pred_fallthru
          _
        %s221 = sand.u32 %s30, 1
        %s222 = scalar_lea.sflag [#allocation3], %s221
        %s223 = sand.u32 %s30, 1
        %s224 = smul.addr %s223, 128
        %s225 = scalar_lea.vmem [#allocation2], %s224
        %p226 = pneg %p43
        %p227 = pneg %p40
        %p228 = pneg %p64
        %p229 = pneg %p61
        %p230 = pneg %p85
        %p231 = pneg %p82
        %p232 = pneg %p106
        %p233 = pneg %p103
        %p234 = pneg %p127
        %p235 = pneg %p124
        %p236 = pneg %p153
        %p237 = pneg %p150
        %s238 = sand.u32 %s140, 1
        %s239 = scalar_lea.sflag [#allocation4], %s238
        %s240 = sand.u32 %s140, 1
        %s241 = smul.addr %s240, 128
        %s242 = scalar_lea.vmem [#allocation5], %s241
        %v243 = vld [vmem:[%s216] sm:$0xff]
        %v244 = vld [vmem:[%s216 + $0x8] sm:$0xff]
        %v245 = vld [vmem:[%s216 + $0x10] sm:$0xff]
        %v246 = vld [vmem:[%s216 + $0x18] sm:$0xff]
        %v247 = vld [vmem:[%s216 + $0x20] sm:$0xff]
        %v248 = vld [vmem:[%s216 + $0x28] sm:$0xff]
        %v249 = vld [vmem:[%s216 + $0x30] sm:$0xff]
        %v250 = vld [vmem:[%s216 + $0x38] sm:$0xff]
        %v251 = vld [vmem:[%s216 + $0x40] sm:$0xff]
        %v252 = vld [vmem:[%s216 + $0x48] sm:$0xff]
        %v253 = vld [vmem:[%s216 + $0x50] sm:$0xff]
        %v254 = vld [vmem:[%s216 + $0x58] sm:$0xff]
        %v255 = vld [vmem:[%s216 + $0x60] sm:$0xff]
        %v256 = vld [vmem:[%s216 + $0x68] sm:$0xff]
        %v257 = vld [vmem:[%s216 + $0x70] sm:$0xff]
        %v258 = vld [vmem:[%s216 + $0x78] sm:$0xff]
        %v259 = vadd.f32 %v243, %v244
        %260 = vadd.xlane.f32.xlu0 %v259
        %v261 = vpop.xlane.xlu0 %260
        %v262 = vadd.f32 %v245, %v246
        %263 = vadd.xlane.f32.xlu0 %v262
        %v264 = vpop.xlane.xlu0 %263
        %v265 = vadd.f32 %v247, %v248
        %266 = vadd.xlane.f32.xlu0 %v265
        %v267 = vpop.xlane.xlu0 %266
        %v268 = vadd.f32 %v249, %v250
        %269 = vadd.xlane.f32.xlu0 %v268
        %v270 = vpop.xlane.xlu0 %269
        %v271 = vadd.f32 %v251, %v252
        %272 = vadd.xlane.f32.xlu0 %v271
        %v273 = vpop.xlane.xlu0 %272
        %v274 = vadd.f32 %v253, %v254
        %275 = vadd.xlane.f32.xlu0 %v274
        %v276 = vpop.xlane.xlu0 %275
        %v277 = vadd.f32 %v255, %v256
        %278 = vadd.xlane.f32.xlu0 %v277
        %v279 = vpop.xlane.xlu0 %278
        %v280 = vadd.f32 %v257, %v258
        %281 = vadd.xlane.f32.xlu0 %v280
        %v282 = vpop.xlane.xlu0 %281
        %v283 = vrcp.pop 256.0
        %v284 = vmul.f32 %v261, %v283
        %v285 = vmul.f32 %v264, %v283
        %v286 = vmul.f32 %v267, %v283
        %v287 = vmul.f32 %v270, %v283
        %v288 = vmul.f32 %v273, %v283
        %v289 = vmul.f32 %v276, %v283
        %v290 = vmul.f32 %v279, %v283
        %v291 = vmul.f32 %v282, %v283
        %v292 = vld [vmem:[%s1] sm:$0xff]
        %v293 = vld [vmem:[%s1 + $0x8] sm:$0xff]
        %v294 = vld [vmem:[%s1 + $0x10] sm:$0xff]
        %v295 = vld [vmem:[%s1 + $0x18] sm:$0xff]
        %v296 = vld [vmem:[%s1 + $0x20] sm:$0xff]
        %v297 = vld [vmem:[%s1 + $0x28] sm:$0xff]
        %v298 = vld [vmem:[%s1 + $0x30] sm:$0xff]
        %v299 = vld [vmem:[%s1 + $0x38] sm:$0xff]
        %v300 = vld [vmem:[%s2] sm:$0x1]
        %v301 = vld [vmem:[%s3] sm:$0xff]
        %v302 = vld [vmem:[%s3 + $0x8] sm:$0xff]
        %v303 = vld [vmem:[%s3 + $0x10] sm:$0xff]
        %v304 = vld [vmem:[%s3 + $0x18] sm:$0xff]
        %v305 = vld [vmem:[%s3 + $0x20] sm:$0xff]
        %v306 = vld [vmem:[%s3 + $0x28] sm:$0xff]
        %v307 = vld [vmem:[%s3 + $0x30] sm:$0xff]
        %v308 = vld [vmem:[%s3 + $0x38] sm:$0xff]
        %v309 = vld [vmem:[%s4] sm:$0xff]
        %v310 = vld [vmem:[%s4 + $0x8] sm:$0xff]
        %v311 = vld [vmem:[%s4 + $0x10] sm:$0xff]
        %v312 = vld [vmem:[%s4 + $0x18] sm:$0xff]
        %v313 = vld [vmem:[%s4 + $0x20] sm:$0xff]
        %v314 = vld [vmem:[%s4 + $0x28] sm:$0xff]
        %v315 = vld [vmem:[%s4 + $0x30] sm:$0xff]
        %v316 = vld [vmem:[%s4 + $0x38] sm:$0xff]
        %v317 = vmul.f32 %v292, %v284
        %v318 = vmul.f32 %v293, %v285
        %v319 = vmul.f32 %v294, %v286
        %v320 = vmul.f32 %v295, %v287
        %v321 = vmul.f32 %v296, %v288
        %v322 = vmul.f32 %v297, %v289
        %v323 = vmul.f32 %v298, %v290
        %v324 = vmul.f32 %v299, %v291
        %vm325 = vcmask 31744
        %v326 = vsel %vm325, %v317, 0.0
        %v327 = vsel %vm325, %v318, 0.0
        %v328 = vadd.f32 %v326, %v327
        %v329 = vsel %vm325, %v319, 0.0
        %v330 = vadd.f32 %v328, %v329
        %v331 = vsel %vm325, %v320, 0.0
        %v332 = vadd.f32 %v330, %v331
        %v333 = vsel %vm325, %v321, 0.0
        %v334 = vadd.f32 %v332, %v333
        %v335 = vsel %vm325, %v322, 0.0
        %v336 = vadd.f32 %v334, %v335
        %v337 = vsel %vm325, %v323, 0.0
        %v338 = vadd.f32 %v336, %v337
        %v339 = vsel %vm325, %v324, 0.0
        %v340 = vadd.f32 %v338, %v339
        %v341 = vrot.slane %v340, 4
        %v342 = vadd.f32 %v340, %v341
        %v343 = vrot.slane %v342, 2
        %v344 = vadd.f32 %v342, %v343
        %v345 = vrot.slane %v344, 1
        %v346 = vadd.f32 %v344, %v345
        %v347 = vadd.f32 %v346, %v300
        %v348 = vmax.f32 %v347, 0.0
        %v349 = vlaneseq
        %v350 = vshrl.u32 %v349, 7
        %v351 = vsub.s32 0, %v350
        %v352 = vrot.slane %v348, %v351
        %v353 = vmul.f32 %v301, %v352
        %v354 = vmul.f32 %v302, %v352
        %v355 = vmul.f32 %v303, %v352
        %v356 = vmul.f32 %v304, %v352
        %v357 = vmul.f32 %v305, %v352
        %v358 = vmul.f32 %v306, %v352
        %v359 = vmul.f32 %v307, %v352
        %v360 = vmul.f32 %v308, %v352
        %v361 = vsel %vm325, %v353, 0.0
        %362 = vadd.xlane.f32.xlu0 %v361
        %v363 = vpop.xlane.xlu0 %362
        %v364 = vsel %vm325, %v354, 0.0
        %365 = vadd.xlane.f32.xlu0 %v364
        %v366 = vpop.xlane.xlu0 %365
        %v367 = vsel %vm325, %v355, 0.0
        %368 = vadd.xlane.f32.xlu0 %v367
        %v369 = vpop.xlane.xlu0 %368
        %v370 = vsel %vm325, %v356, 0.0
        %371 = vadd.xlane.f32.xlu0 %v370
        %v372 = vpop.xlane.xlu0 %371
        %v373 = vsel %vm325, %v357, 0.0
        %374 = vadd.xlane.f32.xlu0 %v373
        %v375 = vpop.xlane.xlu0 %374
        %v376 = vsel %vm325, %v358, 0.0
        %377 = vadd.xlane.f32.xlu0 %v376
        %v378 = vpop.xlane.xlu0 %377
        %v379 = vsel %vm325, %v359, 0.0
        %380 = vadd.xlane.f32.xlu0 %v379
        %v381 = vpop.xlane.xlu0 %380
        %v382 = vsel %vm325, %v360, 0.0
        %383 = vadd.xlane.f32.xlu0 %v382
        %v384 = vpop.xlane.xlu0 %383
        %v385 = vadd.f32 %v363, %v309
        %v386 = vadd.f32 %v366, %v310
        %v387 = vadd.f32 %v369, %v311
        %v388 = vadd.f32 %v372, %v312
        %v389 = vadd.f32 %v375, %v313
        %v390 = vadd.f32 %v378, %v314
        %v391 = vadd.f32 %v381, %v315
        %v392 = vadd.f32 %v384, %v316
        %v393 = vxor.u32 %v385, 2147483648
        %v394 = vxor.u32 %v386, 2147483648
        %v395 = vxor.u32 %v387, 2147483648
        %v396 = vxor.u32 %v388, 2147483648
        %v397 = vxor.u32 %v389, 2147483648
        %v398 = vxor.u32 %v390, 2147483648
        %v399 = vxor.u32 %v391, 2147483648
        %v400 = vxor.u32 %v392, 2147483648
        %v401 = vmul.f32 %v393, 1.442695
        %v402 = vpow.pop %v401
        %v403 = vmul.f32 %v394, 1.442695
        %v404 = vpow.pop %v403
        %v405 = vmul.f32 %v395, 1.442695
        %v406 = vpow.pop %v405
        %v407 = vmul.f32 %v396, 1.442695
        %v408 = vpow.pop %v407
        %v409 = vmul.f32 %v397, 1.442695
        %v410 = vpow.pop %v409
        %v411 = vmul.f32 %v398, 1.442695
        %v412 = vpow.pop %v411
        %v413 = vmul.f32 %v399, 1.442695
        %v414 = vpow.pop %v413
        %v415 = vmul.f32 %v400, 1.442695
        %v416 = vpow.pop %v415
        %v417 = vadd.f32 %v402, 1.0
        %v418 = vadd.f32 %v404, 1.0
        %v419 = vadd.f32 %v406, 1.0
        %v420 = vadd.f32 %v408, 1.0
        %v421 = vadd.f32 %v410, 1.0
        %v422 = vadd.f32 %v412, 1.0
        %v423 = vadd.f32 %v414, 1.0
        %v424 = vadd.f32 %v416, 1.0
        %v425 = vrcp.pop %v417
        %v426 = vmul.f32 1.0, %v425
        %v427 = vrcp.pop %v418
        %v428 = vmul.f32 1.0, %v427
        %v429 = vrcp.pop %v419
        %v430 = vmul.f32 1.0, %v429
        %v431 = vrcp.pop %v420
        %v432 = vmul.f32 1.0, %v431
        %v433 = vrcp.pop %v421
        %v434 = vmul.f32 1.0, %v433
        %v435 = vrcp.pop %v422
        %v436 = vmul.f32 1.0, %v435
        %v437 = vrcp.pop %v423
        %v438 = vmul.f32 1.0, %v437
        %v439 = vrcp.pop %v424
        %v440 = vmul.f32 1.0, %v439
        %442 = vset.pattern.permute.xlu0 0
        %443 = vperm.xlu0 %442, %v426
        %v444 = vpop.permute.xlu0 %443
        %447 = vset.pattern.permute.xlu0 0
        %448 = vperm.xlu0 %447, %v428
        %v449 = vpop.permute.xlu0 %448
        %452 = vset.pattern.permute.xlu0 0
        %453 = vperm.xlu0 %452, %v430
        %v454 = vpop.permute.xlu0 %453
        %457 = vset.pattern.permute.xlu0 0
        %458 = vperm.xlu0 %457, %v432
        %v459 = vpop.permute.xlu0 %458
        %462 = vset.pattern.permute.xlu0 0
        %463 = vperm.xlu0 %462, %v434
        %v464 = vpop.permute.xlu0 %463
        %467 = vset.pattern.permute.xlu0 0
        %468 = vperm.xlu0 %467, %v436
        %v469 = vpop.permute.xlu0 %468
        %472 = vset.pattern.permute.xlu0 0
        %473 = vperm.xlu0 %472, %v438
        %v474 = vpop.permute.xlu0 %473
        %477 = vset.pattern.permute.xlu0 0
        %478 = vperm.xlu0 %477, %v440
        %v479 = vpop.permute.xlu0 %478
        %v481 = vmul.f32 %v243, %v444
        %v482 = vmul.f32 %v244, %v444
        %v483 = vmul.f32 %v245, %v449
        %v484 = vmul.f32 %v246, %v449
        %v485 = vmul.f32 %v247, %v454
        %v486 = vmul.f32 %v248, %v454
        %v487 = vmul.f32 %v249, %v459
        %v488 = vmul.f32 %v250, %v459
        %v489 = vmul.f32 %v251, %v464
        %v490 = vmul.f32 %v252, %v464
        %v491 = vmul.f32 %v253, %v469
        %v492 = vmul.f32 %v254, %v469
        %v493 = vmul.f32 %v255, %v474
        %v494 = vmul.f32 %v256, %v474
        %v495 = vmul.f32 %v257, %v479
        %v496 = vmul.f32 %v258, %v479
        %497 = vst [vmem:[%s242] sm:$0xff] %v481
        %498 = vst [vmem:[%s242 + $0x8] sm:$0xff] %v482
        %499 = vst [vmem:[%s242 + $0x10] sm:$0xff] %v483
        %500 = vst [vmem:[%s242 + $0x18] sm:$0xff] %v484
        %501 = vst [vmem:[%s242 + $0x20] sm:$0xff] %v485
        %502 = vst [vmem:[%s242 + $0x28] sm:$0xff] %v486
        %503 = vst [vmem:[%s242 + $0x30] sm:$0xff] %v487
        %504 = vst [vmem:[%s242 + $0x38] sm:$0xff] %v488
        %505 = vst [vmem:[%s242 + $0x40] sm:$0xff] %v489
        %506 = vst [vmem:[%s242 + $0x48] sm:$0xff] %v490
        %507 = vst [vmem:[%s242 + $0x50] sm:$0xff] %v491
        %508 = vst [vmem:[%s242 + $0x58] sm:$0xff] %v492
        %509 = vst [vmem:[%s242 + $0x60] sm:$0xff] %v493
        %510 = vst [vmem:[%s242 + $0x68] sm:$0xff] %v494
        %511 = vst [vmem:[%s242 + $0x70] sm:$0xff] %v495
        %512 = vst [vmem:[%s242 + $0x78] sm:$0xff] %v496
        %s513 = sand.u32 %s140, 1
        %s514 = scalar_lea.sflag [#allocation4], %s513
        %s515 = sand.u32 %s140, 1
        %s516 = smul.addr %s515, 128
        %s517 = scalar_lea.vmem [#allocation5], %s516
        // Predicated region
        $region45: #{tpu_custom_call.1} parent=39 // pred_check
          %p518 = pneg %p150
        $region46: #{tpu_custom_call.1} parent=39 // pred_check_branch
          %520 = sbr.rel (%p518) target = $region48
        $region47: #{tpu_custom_call.1} parent=39 // pred_region
          %s522 = ssub.s32 2048, 2048
          %523 = vsyncadd %s514, %s522
          %s524 = smul.addr %s22, 16
          %s525 = smul.addr %s524, 128
          %s526 = scalar_lea.hbm %s5, %s525
          %s527 = sshll.u32 %s517, 4
          %s528 = int_to_ptr.vmem [resolvable:$true] %s527
          %533 = dma.vmem_to_hbm [thread:$0]  %s528, 2048, %s526, %s514, 256, 256, 16
        $region48: #{tpu_custom_call.1} parent=39 // pred_fallthru
          _
      $region40: #{tpu_custom_call.1} parent=5 // pred_fallthru
        _
      %p534 = scmp.le.s32.totalorder 2, %s17
      // Predicated region
      $region49: #{tpu_custom_call.1} parent=5 // pred_check
        %p535 = pneg %p534
      $region50: #{tpu_custom_call.1} parent=5 // pred_check_branch
        %537 = sbr.rel (%p535) target = $region52
      $region51: #{tpu_custom_call.1} parent=5 // pred_region
        %s538 = ssub.s32 %s17, 2
        // Predicated region
        $region53: #{tpu_custom_call.1} parent=51 // pred_check
          %p539 = pneg %p156
        $region54: #{tpu_custom_call.1} parent=51 // pred_check_branch
          %541 = sbr.rel (%p539) target = $region56
        $region55: #{tpu_custom_call.1} parent=51 // pred_region
          %s542 = sand.u32 %s141, 1
          %s543 = scalar_lea.sflag [#allocation4], %s542
          %s544 = sand.u32 %s141, 1
          %s545 = smul.addr %s544, 128
          %s546 = scalar_lea.vmem [#allocation5], %s545
          %547 = dma.done %s543, 2048
        $region56: #{tpu_custom_call.1} parent=51 // pred_fallthru
          _
      $region52: #{tpu_custom_call.1} parent=5 // pred_fallthru
        _
    $region6: #{tpu_custom_call.1} parent=1 // loop_footer
      %s21 = sadd.s32 1, %s17
    $region7: #{tpu_custom_call.1} parent=1 // loop_footer_branch
      %16 = sbr.rel target = $region3
    $region8: #{tpu_custom_call.1} parent=1 // loop_exit
      _
    %548 = vsyncpa [#allocation3], 1
    %s549 = scalar_lea.sflag [#allocation3], 1
    %550 = vsyncpa %s549, 1
    %551 = vsyncpa [#allocation4], 1
    %s552 = scalar_lea.sflag [#allocation4], 1
    %553 = vsyncpa %s552, 1

</llo_original>
